<compile_context>
chip_gen: v7x
topology: tpu7x:2x2x1
jax: 0.10.0
libtpu: 0.0.40
codegen_flags: <defaults>
</compile_context>

<pallas_src>
import math
from functools import partial

import jax
import jax.numpy as jnp
from jax import lax
from jax.experimental import pallas as pl
from jax.experimental.pallas import tpu as pltpu

_LANE = 128


def _round_up(x, m):
    return ((x + m - 1) // m) * m


def _device_kind():
    try:
        return (jax.devices()[0].device_kind or "").lower()
    except Exception:  # pragma: no cover
        return ""


def _num_tensorcores_per_chip():
    # v7x packs 2 TensorCores per chip; v5e/v6e have 1.
    kind = _device_kind()
    if "v7" in kind or "7x" in kind:
        return 2
    return 1


def _is_v5():
    # v5-class VPU has no native bf16 VALU -> prefer an f32 epilogue there.
    return "v5" in _device_kind()


def _vmem_budget():
    """Returns (tile_budget_bytes, vmem_limit_bytes) for the current chip."""
    try:
        cap = pltpu.get_tpu_info().vmem_capacity_bytes
    except Exception:  # pragma: no cover - conservative fallback
        cap = 64 * 1024 * 1024
    if cap <= 64 * 1024 * 1024:
        # v7x-class: only 64 MiB VMEM per TC.  Keep explicit headroom for
        # Mosaic internal scratch, gamma, and the f32 reduction temporaries.
        return 32 * 1024 * 1024, 44 * 1024 * 1024
    # v5e / v6e: 128 MiB physical -> raise scoped limit, use bigger tiles.
    return 64 * 1024 * 1024, 96 * 1024 * 1024


def _rmsnorm_kernel(x_ref, w_ref, o_ref, *, scale, eps, bf16_epilogue):
    # x_ref: (rows_tile, dim_p) VMEM
    # w_ref: (1, dim_p)         VMEM, resident (block index always (0,0));
    #        already holds gamma + 1 in the epilogue dtype.
    # o_ref: (rows_tile, dim_p) VMEM
    x = x_ref[...]
    xf = x.astype(jnp.float32)

    # Sum of squares always in f32 (avoids drift for large dim).
    sq = jnp.sum(xf * xf, axis=-1, keepdims=True)                # (rows, 1) f32
    # rsqrt(max(sq, eps^2)) == 1 / max(sqrt(sq), eps) -> F.normalize semantics;
    # rsqrt goes to the EUP slot.  Fold sqrt(dim) into the per-row inverse.
    inv = lax.rsqrt(jnp.maximum(sq, eps * eps)) * scale          # (rows, 1) f32

    if bf16_epilogue:
        # Native bf16 VALU (v6e/v7x): keep the full-tile elementwise work bf16.
        out = (x * inv.astype(x.dtype)) * w_ref[...]
    else:
        # f32 epilogue (f32 inputs, or bf16 on v5e); single cast at the store.
        out = (xf * inv) * w_ref[...]

    o_ref[...] = out.astype(o_ref.dtype)


def rmsnorm(x, gamma, *, rows_tile=None):
    """x: (..., dim), gamma: (dim,). Returns same shape/dtype as x."""
    orig_shape = x.shape
    dim = orig_shape[-1]
    rows = math.prod(orig_shape[:-1]) if len(orig_shape) > 1 else 1
    x2 = x.reshape(rows, dim)

    scale = float(dim) ** 0.5
    eps = 1e-12

    itemsize = jnp.dtype(x.dtype).itemsize
    sublane = max(8, 32 // itemsize)  # 8 for f32, 16 for bf16

    is_bf16 = x.dtype == jnp.bfloat16
    bf16_epilogue = is_bf16 and not _is_v5()

    # Lane-dense layout: pad dim up to a multiple of 128 so stores are full
    # vst (not masked vst.msk).  Zero padding does not change the row norm;
    # padded lanes are sliced off after the call.
    dim_p = _round_up(dim, _LANE)
    if dim_p != dim:
        x2 = jnp.pad(x2, ((0, 0), (0, dim_p - dim)))

    # Precompute w = gamma + 1 once in the wrapper, in the epilogue dtype, so
    # the kernel does no per-tile add/cast on the resident gamma block.
    w_dtype = x.dtype if bf16_epilogue else jnp.float32
    w = gamma.astype(jnp.float32) + 1.0
    if dim_p != dim:
        w = jnp.pad(w, ((0, dim_p - dim),))
    w2 = w.astype(w_dtype).reshape(1, dim_p)

    tile_budget, vmem_limit = _vmem_budget()
    # Per grid step (in input-tile units): 2x in + 2x out (double-buffered)
    # + 1-2 f32 compute temporaries.  bf16 inputs additionally materialize a
    # full-tile f32 copy for the sum-of-squares -> ~2 extra tile units.
    divisor = 8 if is_bf16 else 6
    bytes_per_row = dim_p * itemsize
    if rows_tile is None:
        # Byte-based tile target (no arbitrary row cap): multi-MiB tiles sit
        # near the HBM roofline; per-step overhead is only ~0.35 us.
        tile_bytes = min(16 * 1024 * 1024, tile_budget // divisor)
        rows_tile = max(sublane, tile_bytes // bytes_per_row)

    # Sublane-align the tile and clamp to the (rounded-up) slab size so tiny
    # inputs still form a single valid block.
    rows_tile = max(sublane, (int(rows_tile) // sublane) * sublane)
    rows_tile = min(rows_tile, _round_up(rows, sublane))

    grid = (pl.cdiv(rows, rows_tile),)  # tail block is masked automatically

    cost = pl.CostEstimate(
        flops=3 * rows * dim_p,
        transcendentals=rows,
        bytes_accessed=2 * rows * dim_p * itemsize
        + dim_p * jnp.dtype(w_dtype).itemsize,
    )

    kernel = partial(
        _rmsnorm_kernel, scale=scale, eps=eps, bf16_epilogue=bf16_epilogue
    )

    def build(dim_sems):
        return pl.pallas_call(
            kernel,
            out_shape=jax.ShapeDtypeStruct((rows, dim_p), x.dtype),
            grid_spec=pltpu.PrefetchScalarGridSpec(
                num_scalar_prefetch=0,
                grid=grid,
                in_specs=[
                    pl.BlockSpec((rows_tile, dim_p), lambda i: (i, 0)),
                    pl.BlockSpec((1, dim_p), lambda i: (0, 0)),
                ],
                out_specs=pl.BlockSpec((rows_tile, dim_p), lambda i: (i, 0)),
            ),
            compiler_params=pltpu.CompilerParams(
                dimension_semantics=dim_sems,
                vmem_limit_bytes=vmem_limit,
            ),
            cost_estimate=cost,
        )

    if _num_tensorcores_per_chip() >= 2:
        # v7x: split the row axis across both TensorCores for ~2x HBM streaming
        # (plain "parallel" does not change codegen across cores).
        try:
            out = build((pltpu.CORE_PARALLEL,))(x2, w2)
        except Exception:
            out = build(("parallel",))(x2, w2)
    else:
        out = build(("parallel",))(x2, w2)

    if dim_p != dim:
        out = out[:, :dim]
    return out.reshape(orig_shape)


def rmsnorm_ref(x, gamma):
    # Pure-JAX reference matching PyTorch semantics (computed in f32).
    xf = x.astype(jnp.float32)
    dim = x.shape[-1]
    norm = jnp.maximum(jnp.sqrt(jnp.sum(xf * xf, axis=-1, keepdims=True)), 1e-12)
    return (xf / norm) * (dim ** 0.5) * (gamma.astype(jnp.float32) + 1.0)


if __name__ == "__main__":
    key = jax.random.PRNGKey(0)
    kx, kg, kx2, kx3 = jax.random.split(key, 4)

    # Primary example: matches module init (gamma = zeros).
    batch, seq, hidden = 2, 8, 32
    x = jax.random.normal(kx, (batch, seq, hidden), dtype=jnp.float32)
    gamma = jnp.zeros((hidden,), dtype=jnp.float32)

    out = rmsnorm(x, gamma)
    out = jax.block_until_ready(out)
    ref = rmsnorm_ref(x, gamma)
    assert out.shape == x.shape and out.dtype == x.dtype
    assert jnp.allclose(out, ref, atol=1e-5, rtol=1e-5)

    # Non-trivial gamma + rows not divisible by the tile (masked tail block)
    # + dim<128 lane-padding path.
    gamma_r = 0.1 * jax.random.normal(kg, (hidden,), dtype=jnp.float32)
    x_odd = jax.random.normal(kx2, (2, 7, hidden), dtype=jnp.float32)
    out_odd = jax.block_until_ready(rmsnorm(x_odd, gamma_r, rows_tile=8))
    assert jnp.allclose(out_odd, rmsnorm_ref(x_odd, gamma_r), atol=1e-5, rtol=1e-5)

    # bf16 path: f32 sum-of-squares, generation-dependent epilogue precision.
    x_bf = jax.random.normal(kx3, (2, 8, hidden), dtype=jnp.float32).astype(jnp.bfloat16)
    out_bf = jax.block_until_ready(rmsnorm(x_bf, gamma_r))
    ref_bf = rmsnorm_ref(x_bf, gamma_r)
    assert out_bf.dtype == jnp.bfloat16
    assert jnp.allclose(out_bf.astype(jnp.float32), ref_bf, atol=3e-2, rtol=3e-2)

    print("KERNEL_OK")
</pallas_src>

<mosaic_0001>
module attributes {stable_mosaic.version = 11 : i64} {
  func.func @_rmsnorm_kernel(%arg0: i32, %arg1: memref<16x128xf32, #tpu.memory_space<vmem>>, %arg2: memref<1x128xf32, #tpu.memory_space<vmem>>, %arg3: memref<16x128xf32, #tpu.memory_space<vmem>>) attributes {dimension_semantics = [#tpu.dimension_semantics<parallel>], iteration_bounds = array<i64: 1>, scalar_prefetch = 0 : i64, scratch_operands = 0 : i64, tpu.core_type = #tpu.core_type<tc>, window_params = [{transform_indices = @transform_0, window_bounds = array<i64: 16, 128>}, {pipeline_mode = #tpu.pipeline_mode<synchronous>, transform_indices = @transform_1, window_bounds = array<i64: 1, 128>}, {transform_indices = @transform_2, window_bounds = array<i64: 16, 128>}]} {
    %c0 = arith.constant 0 : index
    %c0_0 = arith.constant 0 : index
    %0 = vector.load %arg1[%c0, %c0_0] : memref<16x128xf32, #tpu.memory_space<vmem>>, vector<16x128xf32>
    %1 = arith.mulf %0, %0 : vector<16x128xf32>
    %cst = arith.constant dense<0.000000e+00> : vector<16xf32>
    %2 = vector.multi_reduction <add>, %1, %cst [1] : vector<16x128xf32> to vector<16xf32>
    %3 = vector.shape_cast %2 : vector<16xf32> to vector<16x1xf32>
    %cst_1 = arith.constant 1.000000e-24 : f32
    %4 = vector.broadcast %cst_1 : f32 to vector<16x1xf32>
    %5 = arith.maximumf %3, %4 : vector<16x1xf32>
    %6 = math.rsqrt %5 : vector<16x1xf32>
    %cst_2 = arith.constant 5.65685415 : f32
    %7 = vector.broadcast %cst_2 : f32 to vector<16x1xf32>
    %8 = arith.mulf %6, %7 : vector<16x1xf32>
    %9 = vector.broadcast %8 : vector<16x1xf32> to vector<16x128xf32>
    %10 = arith.mulf %0, %9 : vector<16x128xf32>
    %c0_3 = arith.constant 0 : index
    %c0_4 = arith.constant 0 : index
    %11 = vector.load %arg2[%c0_3, %c0_4] : memref<1x128xf32, #tpu.memory_space<vmem>>, vector<1x128xf32>
    %12 = vector.broadcast %11 : vector<1x128xf32> to vector<16x128xf32>
    %13 = arith.mulf %10, %12 : vector<16x128xf32>
    %c0_5 = arith.constant 0 : index
    %c0_6 = arith.constant 0 : index
    %14 = vector.load %arg3[%c0_5, %c0_6] : memref<16x128xf32, #tpu.memory_space<vmem>>, vector<16x128xf32>
    tpu.vector_store %arg3[%c0_5, %c0_6], %13 {strides = array<i32>} : memref<16x128xf32, #tpu.memory_space<vmem>>, vector<16x128xf32>,
    return
  }
  func.func @transform_0(%arg0: i32) -> (i32, i32) {
    %c0_i32 = arith.constant 0 : i32
    %c0_i32_0 = arith.constant 0 : i32
    return %arg0, %c0_i32 : i32, i32
  }
  func.func @transform_1(%arg0: i32) -> (i32, i32) {
    %c0_i32 = arith.constant 0 : i32
    %c0_i32_0 = arith.constant 0 : i32
    %c0_i32_1 = arith.constant 0 : i32
    return %c0_i32, %c0_i32_0 : i32, i32
  }
  func.func @transform_2(%arg0: i32) -> (i32, i32) {
    %c0_i32 = arith.constant 0 : i32
    %c0_i32_0 = arith.constant 0 : i32
    return %arg0, %c0_i32 : i32, i32
  }
}

</mosaic_0001>

<llo_original>
// kernel: tpu_custom_call.1
$region0: #{tpu_custom_call.1}
  #allocation0 [shape = 'u32[]', space=smem, size = 0x4, offset = 0x4, fixed_abs, tag = 'smem constant byte address 0x4 - core index']
  #allocation1 [shape = 'u32[144,128]{1,0:T(1,128)}', space=vmem, size = 0x12000, scoped, tag = 'internal scratch']
  %s0 = inlined_call_operand.hbm [shape: f32[16,128], index: 0, kind: input, shape index: {}]
  %s1 = inlined_call_operand.vmem [shape: f32[1,128], index: 1, kind: input, shape index: {}]
  %s2 = inlined_call_operand.hbm [shape: f32[16,128], index: 2, kind: output, shape index: {}]
  %s3 = sld [smem:[#allocation0]]
  $region22: #{tpu_custom_call.1} parent=0
    _
  %s5 = ssub.s32 1, %s3
  %s6 = scalar_select 0, %s5, %s3
  $region1: #{tpu_custom_call.1} parent=0
    #allocation2 [shape = 'u8[8192]{0}', space=vmem, size = 0x2000, scoped, tag = 'input window, operand 0, single buffered']
    #allocation3 [shape = 's32[1]{0}', space=sflag, size = 0x4, scoped, tag = 'scoped memory for tpu_custom_call.1']
    #allocation4 [shape = 's32[1]{0}', space=sflag, size = 0x4, scoped, tag = 'scoped memory for tpu_custom_call.1']
    #allocation5 [shape = 'u8[8192]{0}', space=vmem, size = 0x2000, scoped, tag = 'output window, operand 0, single buffered']
    %7 = vsyncpa [#allocation3], 0
    %8 = vsyncpa [#allocation4], 0
    // Predicated region
    $region2: #{tpu_custom_call.1} parent=1 // pred_check
      _
    $region3: #{tpu_custom_call.1} parent=1 // pred_check_branch
      %10 = sbr.rel (0) target = $region5
    $region4: #{tpu_custom_call.1} parent=1 // pred_region
      %s12 = ssub.s32 256, 256
      %13 = vsyncadd [#allocation3], %s12
      %s14 = sshll.u32 [#allocation2], 4
      %s15 = int_to_ptr.vmem [resolvable:$true] %s14
      %20 = dma.hbm_to_vmem [thread:$0]  %s0, 256, %s15, [#allocation3], 128, 128, 8
    $region5: #{tpu_custom_call.1} parent=1 // pred_fallthru
      _
    // Predicated region
    $region6: #{tpu_custom_call.1} parent=1 // pred_check
      _
    $region7: #{tpu_custom_call.1} parent=1 // pred_check_branch
      %22 = sbr.rel (0) target = $region9
    $region8: #{tpu_custom_call.1} parent=1 // pred_region
      _
    $region9: #{tpu_custom_call.1} parent=1 // pred_fallthru
      _
    // Predicated region
    $region10: #{tpu_custom_call.1} parent=1 // pred_check
      _
    $region11: #{tpu_custom_call.1} parent=1 // pred_check_branch
      %24 = sbr.rel (0) target = $region13
    $region12: #{tpu_custom_call.1} parent=1 // pred_region
      %25 = dma.done [#allocation3], 256
    $region13: #{tpu_custom_call.1} parent=1 // pred_fallthru
      _
    %v26 = vld [vmem:[#allocation2] sm:$0xff]
    %v27 = vld [vmem:[#allocation2 + $0x8] sm:$0xff]
    %v28 = vmul.f32 %v26, %v26
    %v29 = vmul.f32 %v27, %v27
    %30 = vadd.xlane.f32.xlu0 %v28
    %v31 = vpop.xlane.xlu0 %30
    %32 = vadd.xlane.f32.xlu0 %v29
    %v33 = vpop.xlane.xlu0 %32
    %v34 = vmax.f32 %v31, 1e-24
    %v35 = vmax.f32 %v33, 1e-24
    %v36 = vrsqrt.pop %v34
    %v37 = vrsqrt.pop %v35
    %v38 = vmul.f32 %v36, 5.656854
    %v39 = vmul.f32 %v37, 5.656854
    %v40 = vmul.f32 %v26, %v38
    %v41 = vmul.f32 %v27, %v39
    %v42 = vld [vmem:[%s1] sm:$0x1]
    %v44 = vlaneseq
    %v45 = vshrl.u32 %v44, 7
    %v46 = vsub.s32 0, %v45
    %v47 = vrot.slane %v42, %v46
    %v49 = vmul.f32 %v40, %v47
    %v50 = vmul.f32 %v41, %v47
    %51 = vst [vmem:[#allocation5] sm:$0xff] %v49
    %52 = vst [vmem:[#allocation5 + $0x8] sm:$0xff] %v50
    // Predicated region
    $region14: #{tpu_custom_call.1} parent=1 // pred_check
      _
    $region15: #{tpu_custom_call.1} parent=1 // pred_check_branch
      %54 = sbr.rel (0) target = $region17
    $region16: #{tpu_custom_call.1} parent=1 // pred_region
      %s56 = ssub.s32 256, 256
      %57 = vsyncadd [#allocation4], %s56
      %s58 = sshll.u32 [#allocation5], 4
      %s59 = int_to_ptr.vmem [resolvable:$true] %s58
      %64 = dma.vmem_to_hbm [thread:$0]  %s59, 256, %s2, [#allocation4], 128, 128, 8
    $region17: #{tpu_custom_call.1} parent=1 // pred_fallthru
      _
    // Predicated region
    $region18: #{tpu_custom_call.1} parent=1 // pred_check
      _
    $region19: #{tpu_custom_call.1} parent=1 // pred_check_branch
      %66 = sbr.rel (0) target = $region21
    $region20: #{tpu_custom_call.1} parent=1 // pred_region
      %67 = dma.done [#allocation4], 256
    $region21: #{tpu_custom_call.1} parent=1 // pred_fallthru
      _
    %68 = vsyncpa [#allocation3], 1
    %69 = vsyncpa [#allocation4], 1

</llo_original>
